<compile_context>
chip_gen: v6e
topology: v6e:2x2x1
jax: 0.10.0
libtpu: 0.0.40
codegen_flags: <defaults>
</compile_context>

<pallas_src>
import functools

import jax
import jax.numpy as jnp
import numpy as np
from jax import lax
from jax.experimental import pallas as pl
from jax.experimental.pallas import tpu as pltpu


# Safe on every generation: <= scoped default on v6e/v7x, raises v5e's 16 MiB
# default, and well under physical VMEM everywhere.  Tiles below are chosen to
# use only a few MiB so there is ample double-buffering headroom.
_VMEM_LIMIT_BYTES = 32 * 1024 * 1024


def _pick_tile(dim, max_tile, align):
    """Largest tile <= max_tile that divides `dim` and is a multiple of `align`.

    Falls back to the full dimension, which is always a legal block shape
    (block dim == array dim).
    """
    if dim <= max_tile:
        return dim
    t = (max_tile // align) * align
    while t >= align:
        if dim % t == 0:
            return t
        t -= align
    return dim


# ---------------------------------------------------------------------------
# Tiled linear kernel: y = x @ w + b
# ---------------------------------------------------------------------------

def _linear_kernel(x_ref, w_ref, b_ref, o_ref, acc_ref):
    k = pl.program_id(2)

    @pl.when(k == 0)
    def _init():
        acc_ref[...] = jnp.zeros_like(acc_ref)

    acc_ref[...] += jnp.dot(x_ref[...], w_ref[...],
                            preferred_element_type=jnp.float32)

    @pl.when(k == pl.num_programs(2) - 1)
    def _finalize():
        o_ref[...] = (acc_ref[...] + b_ref[...].astype(jnp.float32)
                      ).astype(o_ref.dtype)


def pallas_linear(x2d, w, b, *, tm=512, tn=256, tk=512):
    """y = x2d @ w + b with a pipelined (M, N, K) grid and fp32 accumulation."""
    M, Cin = x2d.shape
    Cout = w.shape[1]

    tm = _pick_tile(M, tm, 8)       # sublane-aligned rows
    tn = _pick_tile(Cout, tn, 128)  # lane-aligned output columns
    tk = _pick_tile(Cin, tk, 128)   # lane-aligned contraction tiles
    gm, gn, gk = M // tm, Cout // tn, Cin // tk

    itemsize = jnp.dtype(x2d.dtype).itemsize
    cost = pl.CostEstimate(
        flops=2 * M * Cin * Cout,
        transcendentals=0,
        bytes_accessed=(M * Cin + Cin * Cout + M * Cout) * itemsize + Cout * 4,
    )

    return pl.pallas_call(
        _linear_kernel,
        out_shape=jax.ShapeDtypeStruct((M, Cout), x2d.dtype),
        grid_spec=pltpu.PrefetchScalarGridSpec(
            num_scalar_prefetch=0,
            grid=(gm, gn, gk),
            in_specs=[
                pl.BlockSpec((tm, tk), lambda i, j, k: (i, k)),
                pl.BlockSpec((tk, tn), lambda i, j, k: (k, j)),
                pl.BlockSpec((1, tn), lambda i, j, k: (0, j)),
            ],
            out_specs=pl.BlockSpec((tm, tn), lambda i, j, k: (i, j)),
            scratch_shapes=[pltpu.VMEM((tm, tn), jnp.float32)],
        ),
        compiler_params=pltpu.CompilerParams(
            dimension_semantics=("parallel", "parallel", "arbitrary"),
            vmem_limit_bytes=_VMEM_LIMIT_BYTES,
        ),
        cost_estimate=cost,
    )(x2d, w, b.reshape(1, Cout))


# ---------------------------------------------------------------------------
# Cross-attention kernel: one batch (all heads) per grid step
# ---------------------------------------------------------------------------

def _mhca_attn_kernel(q_ref, kv_ref, o_ref, *, scale):
    # q_ref:  (1, N, H, hd)       one batch, all heads
    # kv_ref: (1, Nc, 2, H, hd)   k = [:, :, 0], v = [:, :, 1]
    # o_ref:  (1, N, H*hd)        head-merged, lane-dense output tile
    _, N, H, hd = q_ref.shape
    dtype = q_ref.dtype

    # Fold the softmax scale into q once (N*H*hd multiplies, done in the
    # activation dtype like the reference `q = q * self.scale`).
    q_all = q_ref[0] * jnp.asarray(scale, dtype)   # (N, H, hd)
    k_all = kv_ref[0, :, 0]                        # (Nc, H, hd)
    v_all = kv_ref[0, :, 1]                        # (Nc, H, hd)

    # TODO(synk): for long sequences (large N*Nc) switch to a flash-style
    # online softmax with a kv grid axis instead of materializing (N, Nc).
    for h in range(H):  # static, unrolled; H is small
        qh = q_all[:, h, :]                        # (N, hd)   activation dtype
        kh = k_all[:, h, :]                        # (Nc, hd)
        vh = v_all[:, h, :]                        # (Nc, hd)

        # q @ k^T without an explicit transpose: contract the last axes.
        s = lax.dot_general(qh, kh,
                            dimension_numbers=(((1,), (1,)), ((), ())),
                            preferred_element_type=jnp.float32)  # (N, Nc) fp32

        # fp32 softmax; denominator reciprocal on the (otherwise idle) EUP.
        s = s - jnp.max(s, axis=-1, keepdims=True)
        p = jnp.exp(s)
        p = p * pl.reciprocal(jnp.sum(p, axis=-1, keepdims=True), approx=True)
        p = p.astype(vh.dtype)                     # reference casts probs back

        oh = jnp.dot(p, vh, preferred_element_type=jnp.float32)  # (N, hd)
        o_ref[0, :, h * hd:(h + 1) * hd] = oh.astype(o_ref.dtype)


def pallas_cross_attention(q_bnhd, kv_bn2hd, scale):
    """q: (B, N, H, hd), kv: (B, Nc, 2, H, hd) -> head-merged (B, N, H*hd)."""
    B, N, H, hd = q_bnhd.shape
    Nc = kv_bn2hd.shape[1]
    C = H * hd

    itemsize = jnp.dtype(q_bnhd.dtype).itemsize
    cost = pl.CostEstimate(
        flops=4 * B * H * N * Nc * hd,
        transcendentals=B * H * N * Nc,
        bytes_accessed=(B * N * C + B * Nc * 2 * C + B * N * C) * itemsize,
    )

    kernel = functools.partial(_mhca_attn_kernel, scale=scale)
    return pl.pallas_call(
        kernel,
        out_shape=jax.ShapeDtypeStruct((B, N, C), q_bnhd.dtype),
        grid=(B,),
        in_specs=[
            pl.BlockSpec((1, N, H, hd), lambda b: (b, 0, 0, 0)),
            pl.BlockSpec((1, Nc, 2, H, hd), lambda b: (b, 0, 0, 0, 0)),
        ],
        out_specs=pl.BlockSpec((1, N, C), lambda b: (b, 0, 0)),
        compiler_params=pltpu.CompilerParams(
            dimension_semantics=("parallel",),
            vmem_limit_bytes=_VMEM_LIMIT_BYTES,
        ),
        cost_estimate=cost,
    )(q_bnhd, kv_bn2hd)


# ---------------------------------------------------------------------------
# Module wrapper (all reshapes below are contiguous -> metadata-only, no HBM
# transposes; every matmul / attention op runs in a Pallas kernel)
# ---------------------------------------------------------------------------

def init_params(key, d_model):
    """Deterministic init mimicking nn.Linear (uniform +-1/sqrt(fan_in)).
    Weights stored as (in, out), i.e. transposed vs PyTorch's (out, in)."""
    bound = 1.0 / np.sqrt(d_model)
    ks = jax.random.split(key, 6)
    u = lambda k, shape: jax.random.uniform(k, shape, jnp.float32, -bound, bound)
    return {
        "wq": u(ks[0], (d_model, d_model)),
        "bq": u(ks[1], (d_model,)),
        "wkv": u(ks[2], (d_model, 2 * d_model)),
        "bkv": u(ks[3], (2 * d_model,)),
        "wproj": u(ks[4], (d_model, d_model)),
        "bproj": u(ks[5], (d_model,)),
    }


def multi_head_cross_attention(x, cond, params, num_heads):
    B, N, C = x.shape
    Bc, Nc, Cc = cond.shape
    assert Bc == B and Cc == C and C % num_heads == 0
    hd = C // num_heads
    scale = hd ** (-0.5)

    # Projections (tiled / pipelined Pallas matmuls).
    q = pallas_linear(x.reshape(B * N, C), params["wq"], params["bq"])          # (B*N, C)
    kv = pallas_linear(cond.reshape(B * Nc, C), params["wkv"], params["bkv"])   # (B*Nc, 2C)

    # Head split is a contiguous reshape (free); matches
    # kv.view(B, Nc, 2, H, hd) / q.view(B, N, H, hd) in PyTorch.
    q = q.reshape(B, N, num_heads, hd)
    kv = kv.reshape(B, Nc, 2, num_heads, hd)

    # Attention: one batch (all heads) per grid step, head-merged output.
    o = pallas_cross_attention(q, kv, scale)                                    # (B, N, C)

    # Output projection. attn_drop / proj_drop are identity in eval mode.
    out = pallas_linear(o.reshape(B * N, C), params["wproj"], params["bproj"])
    return out.reshape(B, N, C)


def reference_forward(x, cond, params, num_heads):
    """Pure-JAX reference matching the PyTorch module (eval, mask=None)."""
    B, N, C = x.shape
    Nc = cond.shape[1]
    hd = C // num_heads
    scale = hd ** (-0.5)
    q = x.reshape(B * N, C) @ params["wq"] + params["bq"]
    kv = cond.reshape(B * Nc, C) @ params["wkv"] + params["bkv"]
    q = q.reshape(B, N, num_heads, hd).transpose(0, 2, 1, 3)
    kv = kv.reshape(B, Nc, 2, num_heads, hd)
    k = kv[:, :, 0].transpose(0, 2, 1, 3)
    v = kv[:, :, 1].transpose(0, 2, 1, 3)
    q = q * scale
    s = jnp.einsum("bhnd,bhmd->bhnm", q, k)
    p = jax.nn.softmax(s.astype(jnp.float32), axis=-1).astype(x.dtype)
    o = jnp.einsum("bhnm,bhmd->bhnd", p, v)
    o = o.transpose(0, 2, 1, 3).reshape(B * N, C)
    return (o @ params["wproj"] + params["bproj"]).reshape(B, N, C)


if __name__ == "__main__":
    B, N, Nc = 2, 16, 8
    d_model, num_heads = 32, 4

    key = jax.random.PRNGKey(0)
    kx, kc, kp = jax.random.split(key, 3)
    x = jax.random.normal(kx, (B, N, d_model), jnp.float32)
    cond = jax.random.normal(kc, (B, Nc, d_model), jnp.float32)
    params = init_params(kp, d_model)

    out = multi_head_cross_attention(x, cond, params, num_heads)
    out = jax.block_until_ready(out)

    ref = reference_forward(x, cond, params, num_heads)
    # Tolerance accounts for the approximate EUP reciprocal in the softmax
    # denominator (with approx=False the kernel matches to ~1e-6).
    np.testing.assert_allclose(np.asarray(out), np.asarray(ref),
                               rtol=5e-3, atol=5e-3)

    print("KERNEL_OK")
</pallas_src>

<mosaic_0001>
module attributes {stable_mosaic.version = 11 : i64} {
  func.func @_linear_kernel(%arg0: i32, %arg1: i32, %arg2: i32, %arg3: memref<32x32xf32, #tpu.memory_space<vmem>>, %arg4: memref<32x32xf32, #tpu.memory_space<vmem>>, %arg5: memref<1x32xf32, #tpu.memory_space<vmem>>, %arg6: memref<32x32xf32, #tpu.memory_space<vmem>>, %arg7: memref<32x32xf32, #tpu.memory_space<vmem>>) attributes {dimension_semantics = [#tpu.dimension_semantics<parallel>, #tpu.dimension_semantics<parallel>, #tpu.dimension_semantics<arbitrary>], iteration_bounds = array<i64: 1, 1, 1>, scalar_prefetch = 0 : i64, scratch_operands = 1 : i64, tpu.core_type = #tpu.core_type<tc>, window_params = [{transform_indices = @transform_0, window_bounds = array<i64: 32, 32>}, {transform_indices = @transform_1, window_bounds = array<i64: 32, 32>}, {transform_indices = @transform_2, window_bounds = array<i64: 1, 32>}, {transform_indices = @transform_3, window_bounds = array<i64: 32, 32>}]} {
    %c0_i32 = arith.constant 0 : i32
    %0 = arith.cmpi eq, %arg2, %c0_i32 : i32
    %1 = arith.extui %0 : i1 to i32
    %c0_i32_0 = arith.constant 0 : i32
    %2 = arith.cmpi ne, %1, %c0_i32_0 : i32
    scf.if %2 {
      %cst_10 = arith.constant 0.000000e+00 : f32
      %12 = vector.broadcast %cst_10 : f32 to vector<32x32xf32>
      %c0_11 = arith.constant 0 : index
      %c0_12 = arith.constant 0 : index
      %13 = vector.load %arg7[%c0_11, %c0_12] : memref<32x32xf32, #tpu.memory_space<vmem>>, vector<32x32xf32>
      tpu.vector_store %arg7[%c0_11, %c0_12], %12 {strides = array<i32>} : memref<32x32xf32, #tpu.memory_space<vmem>>, vector<32x32xf32>,
    } else {
    }
    %c0 = arith.constant 0 : index
    %c0_1 = arith.constant 0 : index
    %3 = vector.load %arg7[%c0, %c0_1] : memref<32x32xf32, #tpu.memory_space<vmem>>, vector<32x32xf32>
    %c0_2 = arith.constant 0 : index
    %c0_3 = arith.constant 0 : index
    %4 = vector.load %arg3[%c0_2, %c0_3] : memref<32x32xf32, #tpu.memory_space<vmem>>, vector<32x32xf32>
    %c0_4 = arith.constant 0 : index
    %c0_5 = arith.constant 0 : index
    %5 = vector.load %arg4[%c0_4, %c0_5] : memref<32x32xf32, #tpu.memory_space<vmem>>, vector<32x32xf32>
    %cst = arith.constant dense<0.000000e+00> : vector<32x32xf32>
    %6 = tpu.matmul %4, %5, %cst {dimension_numbers = #tpu.dot_dimension_numbers<[1], [0], [0], [1], [0, 0, 1, 1], [], []>} : vector<32x32xf32>, vector<32x32xf32>, vector<32x32xf32> -> vector<32x32xf32>
    %7 = arith.addf %3, %6 : vector<32x32xf32>
    %c0_6 = arith.constant 0 : index
    %c0_7 = arith.constant 0 : index
    %8 = vector.load %arg7[%c0_6, %c0_7] : memref<32x32xf32, #tpu.memory_space<vmem>>, vector<32x32xf32>
    tpu.vector_store %arg7[%c0_6, %c0_7], %7 {strides = array<i32>} : memref<32x32xf32, #tpu.memory_space<vmem>>, vector<32x32xf32>,
    %c0_i32_8 = arith.constant 0 : i32
    %9 = arith.cmpi eq, %arg2, %c0_i32_8 : i32
    %10 = arith.extui %9 : i1 to i32
    %c0_i32_9 = arith.constant 0 : i32
    %11 = arith.cmpi ne, %10, %c0_i32_9 : i32
    scf.if %11 {
      %c0_10 = arith.constant 0 : index
      %c0_11 = arith.constant 0 : index
      %12 = vector.load %arg7[%c0_10, %c0_11] : memref<32x32xf32, #tpu.memory_space<vmem>>, vector<32x32xf32>
      %c0_12 = arith.constant 0 : index
      %c0_13 = arith.constant 0 : index
      %13 = vector.load %arg5[%c0_12, %c0_13] : memref<1x32xf32, #tpu.memory_space<vmem>>, vector<1x32xf32>
      %14 = vector.broadcast %13 : vector<1x32xf32> to vector<32x32xf32>
      %15 = arith.addf %12, %14 : vector<32x32xf32>
      %c0_14 = arith.constant 0 : index
      %c0_15 = arith.constant 0 : index
      %16 = vector.load %arg6[%c0_14, %c0_15] : memref<32x32xf32, #tpu.memory_space<vmem>>, vector<32x32xf32>
      tpu.vector_store %arg6[%c0_14, %c0_15], %15 {strides = array<i32>} : memref<32x32xf32, #tpu.memory_space<vmem>>, vector<32x32xf32>,
    } else {
    }
    return
  }
  func.func @transform_0(%arg0: i32, %arg1: i32, %arg2: i32) -> (i32, i32) {
    %c0_i32 = arith.constant 0 : i32
    return %arg0, %arg2 : i32, i32
  }
  func.func @transform_1(%arg0: i32, %arg1: i32, %arg2: i32) -> (i32, i32) {
    %c0_i32 = arith.constant 0 : i32
    return %arg2, %arg1 : i32, i32
  }
  func.func @transform_2(%arg0: i32, %arg1: i32, %arg2: i32) -> (i32, i32) {
    %c0_i32 = arith.constant 0 : i32
    %c0_i32_0 = arith.constant 0 : i32
    return %c0_i32, %arg1 : i32, i32
  }
  func.func @transform_3(%arg0: i32, %arg1: i32, %arg2: i32) -> (i32, i32) {
    %c0_i32 = arith.constant 0 : i32
    return %arg0, %arg1 : i32, i32
  }
}

</mosaic_0001>

<llo_original>
// kernel: tpu_custom_call.1
$region0: #{tpu_custom_call.1}
  #allocation0 [shape = 'u32[]', space=smem, size = 0x4, offset = 0x4, fixed_abs, tag = 'smem constant byte address 0x4 - core index']
  #allocation1 [shape = 'u32[144,128]{1,0:T(1,128)}', space=vmem, size = 0x12000, scoped, tag = 'internal scratch']
  #allocation2 [shape = 'f32[32,32]{1,0:T(8,128)}', space=vmem, size = 0x4000, scoped, tag = 'scratch operand']
  %s0 = inlined_call_operand.hbm [shape: f32[32,32], index: 0, kind: input, shape index: {}]
  %s1 = inlined_call_operand.hbm [shape: f32[32,32], index: 1, kind: input, shape index: {}]
  %s2 = inlined_call_operand.vmem [shape: f32[1,32], index: 2, kind: input, shape index: {}]
  %s3 = inlined_call_operand.hbm [shape: f32[32,32], index: 3, kind: output, shape index: {}]
  %s4 = sld [smem:[#allocation0]]
  $region38: #{tpu_custom_call.1} parent=0
    _
  %s6 = ssub.s32 1, %s4
  %s7 = scalar_select 0, %s6, %s4
  $region1: #{tpu_custom_call.1} parent=0
    #allocation3 [shape = 'u8[16384]{0}', space=vmem, size = 0x4000, scoped, tag = 'input window, operand 0, single buffered']
    #allocation4 [shape = 's32[1]{0}', space=sflag, size = 0x4, scoped, tag = 'scoped memory for tpu_custom_call.1']
    #allocation5 [shape = 's32[1]{0}', space=sflag, size = 0x4, scoped, tag = 'scoped memory for tpu_custom_call.1']
    #allocation6 [shape = 'u8[16384]{0}', space=vmem, size = 0x4000, scoped, tag = 'input window, operand 1, single buffered']
    #allocation7 [shape = 's32[1]{0}', space=sflag, size = 0x4, scoped, tag = 'scoped memory for tpu_custom_call.1']
    #allocation8 [shape = 'u8[16384]{0}', space=vmem, size = 0x4000, scoped, tag = 'output window, operand 0, single buffered']
    %8 = vsyncpa [#allocation4], 0
    %9 = vsyncpa [#allocation7], 0
    %10 = vsyncpa [#allocation5], 0
    // Predicated region
    $region2: #{tpu_custom_call.1} parent=1 // pred_check
      _
    $region3: #{tpu_custom_call.1} parent=1 // pred_check_branch
      %12 = sbr.rel (0) target = $region5
    $region4: #{tpu_custom_call.1} parent=1 // pred_region
      %s14 = ssub.s32 512, 512
      %15 = vsyncadd [#allocation4], %s14
      %s16 = sshll.u32 [#allocation3], 4
      %s17 = int_to_ptr.vmem [resolvable:$true] %s16
      %22 = dma.hbm_to_vmem [thread:$0]  %s0, 512, %s17, [#allocation4], 128, 128, 8
    $region5: #{tpu_custom_call.1} parent=1 // pred_fallthru
      _
    // Predicated region
    $region6: #{tpu_custom_call.1} parent=1 // pred_check
      _
    $region7: #{tpu_custom_call.1} parent=1 // pred_check_branch
      %24 = sbr.rel (0) target = $region9
    $region8: #{tpu_custom_call.1} parent=1 // pred_region
      %s26 = ssub.s32 512, 512
      %27 = vsyncadd [#allocation7], %s26
      %s28 = sshll.u32 [#allocation6], 4
      %s29 = int_to_ptr.vmem [resolvable:$true] %s28
      %34 = dma.hbm_to_vmem [thread:$0]  %s1, 512, %s29, [#allocation7], 128, 128, 8
    $region9: #{tpu_custom_call.1} parent=1 // pred_fallthru
      _
    // Predicated region
    $region10: #{tpu_custom_call.1} parent=1 // pred_check
      _
    $region11: #{tpu_custom_call.1} parent=1 // pred_check_branch
      %36 = sbr.rel (0) target = $region13
    $region12: #{tpu_custom_call.1} parent=1 // pred_region
      _
    $region13: #{tpu_custom_call.1} parent=1 // pred_fallthru
      _
    // Predicated region
    $region14: #{tpu_custom_call.1} parent=1 // pred_check
      _
    $region15: #{tpu_custom_call.1} parent=1 // pred_check_branch
      %38 = sbr.rel (0) target = $region17
    $region16: #{tpu_custom_call.1} parent=1 // pred_region
      %39 = dma.done [#allocation4], 512
    $region17: #{tpu_custom_call.1} parent=1 // pred_fallthru
      _
    // Predicated region
    $region18: #{tpu_custom_call.1} parent=1 // pred_check
      _
    $region19: #{tpu_custom_call.1} parent=1 // pred_check_branch
      %41 = sbr.rel (0) target = $region21
    $region20: #{tpu_custom_call.1} parent=1 // pred_region
      %42 = dma.done [#allocation7], 512
    $region21: #{tpu_custom_call.1} parent=1 // pred_fallthru
      _
    %p43 = scmp.eq.s32.totalorder 0, 0
    // Predicated region
    $region22: #{tpu_custom_call.1} parent=1 // pred_check
      %p44 = pneg %p43
    $region23: #{tpu_custom_call.1} parent=1 // pred_check_branch
      %46 = sbr.rel (%p44) target = $region25
    $region24: #{tpu_custom_call.1} parent=1 // pred_region
      %vm47 = vcmask 261120
      %48 = vst.msk [vmem:[#allocation2] sm:$0xff] %vm47, 0.0
      %49 = vst.msk [vmem:[#allocation2 + $0x8] sm:$0xff] %vm47, 0.0
      %50 = vst.msk [vmem:[#allocation2 + $0x10] sm:$0xff] %vm47, 0.0
      %51 = vst.msk [vmem:[#allocation2 + $0x18] sm:$0xff] %vm47, 0.0
    $region25: #{tpu_custom_call.1} parent=1 // pred_fallthru
      _
    %v52 = vld [vmem:[#allocation2] sm:$0xff]
    %v53 = vld [vmem:[#allocation2 + $0x8] sm:$0xff]
    %v54 = vld [vmem:[#allocation2 + $0x10] sm:$0xff]
    %v55 = vld [vmem:[#allocation2 + $0x18] sm:$0xff]
    %v56 = vld [vmem:[#allocation3] sm:$0xff]
    %v57 = vld [vmem:[#allocation3 + $0x8] sm:$0xff]
    %v58 = vld [vmem:[#allocation3 + $0x10] sm:$0xff]
    %v59 = vld [vmem:[#allocation3 + $0x18] sm:$0xff]
    %v60 = vld [vmem:[#allocation6] sm:$0xff]
    %v61 = vld [vmem:[#allocation6 + $0x8] sm:$0xff]
    %v62 = vld [vmem:[#allocation6 + $0x10] sm:$0xff]
    %v63 = vld [vmem:[#allocation6 + $0x18] sm:$0xff]
    %vm64 = vcmask 261120
    %v66 = vsel %vm64, %v56, 0
    %v69 = vsel %vm64, %v57, 0
    %v72 = vsel %vm64, %v58, 0
    %v75 = vsel %vm64, %v59, 0
    %77 = vmatprep.subr.mxu0 0.0
    %78 = vmatpush1.msra.mxu0 0.0
    %79 = vmatprep.subr.mxu0 0.0
    %80 = vmatpush1.msra.mxu0 0.0
    %81 = vmatprep.subr.mxu0 0.0
    %82 = vmatpush1.msra.mxu0 0.0
    %83 = vmatprep.subr.mxu0 0.0
    %84 = vmatpush1.msra.mxu0 0.0
    %85 = vmatprep.subr.mxu0 0.0
    %86 = vmatpush1.msra.mxu0 0.0
    %87 = vmatprep.subr.mxu0 0.0
    %88 = vmatpush1.msra.mxu0 0.0
    %89 = vmatprep.subr.mxu0 0.0
    %90 = vmatpush1.msra.mxu0 0.0
    %91 = vmatprep.subr.mxu0 0.0
    %92 = vmatpush1.msra.mxu0 0.0
    %93 = vmatprep.subr.mxu0 0.0
    %94 = vmatpush1.msra.mxu0 0.0
    %95 = vmatprep.subr.mxu0 0.0
    %96 = vmatpush1.msra.mxu0 0.0
    %97 = vmatprep.subr.mxu0 0.0
    %98 = vmatpush1.msra.mxu0 0.0
    %99 = vmatprep.subr.mxu0 0.0
    %100 = vmatpush1.msra.mxu0 0.0
    %101 = vmatprep.subr.mxu0 0.0
    %102 = vmatpush1.msra.mxu0 %v63
    %103 = vmatprep.subr.mxu0 0.0
    %104 = vmatpush1.msra.mxu0 %v62
    %105 = vmatprep.subr.mxu0 0.0
    %106 = vmatpush1.msra.mxu0 %v61
    %107 = vmatprep.subr.mxu0 0.0
    %108 = vmatpush1.msra.mxu0 %v60
    %109 = vmatprep.subr.mxu0 0.0
    %110 = vmatpush2.msra.mxu0 0.0
    %111 = vmatprep.subr.mxu0 0.0
    %112 = vmatpush2.msra.mxu0 0.0
    %113 = vmatprep.subr.mxu0 0.0
    %114 = vmatpush2.msra.mxu0 0.0
    %115 = vmatprep.subr.mxu0 0.0
    %116 = vmatpush2.msra.mxu0 0.0
    %117 = vmatprep.subr.mxu0 0.0
    %118 = vmatpush2.msra.mxu0 0.0
    %119 = vmatprep.subr.mxu0 0.0
    %120 = vmatpush2.msra.mxu0 0.0
    %121 = vmatprep.subr.mxu0 0.0
    %122 = vmatpush2.msra.mxu0 0.0
    %123 = vmatprep.subr.mxu0 0.0
    %124 = vmatpush2.msra.mxu0 0.0
    %125 = vmatprep.subr.mxu0 0.0
    %126 = vmatpush2.msra.mxu0 0.0
    %127 = vmatprep.subr.mxu0 0.0
    %128 = vmatpush2.msra.mxu0 0.0
    %129 = vmatprep.subr.mxu0 0.0
    %130 = vmatpush2.msra.mxu0 0.0
    %131 = vmatprep.subr.mxu0 0.0
    %132 = vmatpush2.msra.mxu0 0.0
    %133 = vmatprep.subr.mxu0 0.0
    %134 = vmatpush2.msra.mxu0 0.0
    %135 = vmatprep.subr.mxu0 0.0
    %136 = vmatpush2.msra.mxu0 0.0
    %137 = vmatprep.subr.mxu0 0.0
    %138 = vmatpush2.msra.mxu0 0.0
    %139 = vmatprep.subr.mxu0 0.0
    %140 = vmatpush2.msra.mxu0 0.0
    %141 = vmatprep.mubr.f32.mxu0 0.0
    %142 = vmatmul.mubr.f32.gmra.mxu0 %v66
    %v143 = vpop.f32.mrf.mxu0
    %v144 = vadd.f32 0.0, %v143
    %v145 = vpop.f32.mrf.mxu0
    %146 = vmatprep.mubr.f32.mxu0 0.0
    %147 = vmatmul.mubr.f32.gmra.mxu0 %v69
    %v148 = vpop.f32.mrf.mxu0
    %v149 = vadd.f32 0.0, %v148
    %v150 = vpop.f32.mrf.mxu0
    %151 = vmatprep.mubr.f32.mxu0 0.0
    %152 = vmatmul.mubr.f32.gmra.mxu0 %v72
    %v153 = vpop.f32.mrf.mxu0
    %v154 = vadd.f32 0.0, %v153
    %v155 = vpop.f32.mrf.mxu0
    %156 = vmatprep.mubr.f32.mxu0 0.0
    %157 = vmatmul.mubr.f32.gmra.mxu0 %v75
    %v158 = vpop.f32.mrf.mxu0
    %v159 = vadd.f32 0.0, %v158
    %v160 = vpop.f32.mrf.mxu0
    %161 = vdwg.mxu0
    %v162 = vadd.f32 %v52, %v144
    %v163 = vadd.f32 %v53, %v149
    %v164 = vadd.f32 %v54, %v154
    %v165 = vadd.f32 %v55, %v159
    %166 = vst.msk [vmem:[#allocation2] sm:$0xff] %vm64, %v162
    %167 = vst.msk [vmem:[#allocation2 + $0x8] sm:$0xff] %vm64, %v163
    %168 = vst.msk [vmem:[#allocation2 + $0x10] sm:$0xff] %vm64, %v164
    %169 = vst.msk [vmem:[#allocation2 + $0x18] sm:$0xff] %vm64, %v165
    // Predicated region
    $region26: #{tpu_custom_call.1} parent=1 // pred_check
      %p170 = pneg %p43
    $region27: #{tpu_custom_call.1} parent=1 // pred_check_branch
      %172 = sbr.rel (%p170) target = $region29
    $region28: #{tpu_custom_call.1} parent=1 // pred_region
      %v173 = vld [vmem:[#allocation2] sm:$0xff]
      %v174 = vld [vmem:[#allocation2 + $0x8] sm:$0xff]
      %v175 = vld [vmem:[#allocation2 + $0x10] sm:$0xff]
      %v176 = vld [vmem:[#allocation2 + $0x18] sm:$0xff]
      %v177 = vld [vmem:[%s2] sm:$0x1]
      %v179 = vlaneseq
      %v180 = vshrl.u32 %v179, 7
      %v181 = vsub.s32 0, %v180
      %v182 = vrot.slane %v177, %v181
      %v184 = vadd.f32 %v173, %v182
      %v185 = vadd.f32 %v174, %v182
      %v186 = vadd.f32 %v175, %v182
      %v187 = vadd.f32 %v176, %v182
      %188 = vst.msk [vmem:[#allocation8] sm:$0xff] %vm64, %v184
      %189 = vst.msk [vmem:[#allocation8 + $0x8] sm:$0xff] %vm64, %v185
      %190 = vst.msk [vmem:[#allocation8 + $0x10] sm:$0xff] %vm64, %v186
      %191 = vst.msk [vmem:[#allocation8 + $0x18] sm:$0xff] %vm64, %v187
    $region29: #{tpu_custom_call.1} parent=1 // pred_fallthru
      _
    // Predicated region
    $region30: #{tpu_custom_call.1} parent=1 // pred_check
      _
    $region31: #{tpu_custom_call.1} parent=1 // pred_check_branch
      %193 = sbr.rel (0) target = $region33
    $region32: #{tpu_custom_call.1} parent=1 // pred_region
      %s195 = ssub.s32 512, 512
      %196 = vsyncadd [#allocation5], %s195
      %s197 = sshll.u32 [#allocation8], 4
      %s198 = int_to_ptr.vmem [resolvable:$true] %s197
      %203 = dma.vmem_to_hbm [thread:$0]  %s198, 512, %s3, [#allocation5], 128, 128, 8
    $region33: #{tpu_custom_call.1} parent=1 // pred_fallthru
      _
    // Predicated region
    $region34: #{tpu_custom_call.1} parent=1 // pred_check
      _
    $region35: #{tpu_custom_call.1} parent=1 // pred_check_branch
      %205 = sbr.rel (0) target = $region37
    $region36: #{tpu_custom_call.1} parent=1 // pred_region
      %206 = dma.done [#allocation5], 512
    $region37: #{tpu_custom_call.1} parent=1 // pred_fallthru
      _
    %207 = vsyncpa [#allocation4], 1
    %208 = vsyncpa [#allocation7], 1
    %209 = vsyncpa [#allocation5], 1

</llo_original>
